<compile_context>
chip_gen: v5e
topology: v5e:2x2
jax: 0.10.0
libtpu: 0.0.40
codegen_flags: <defaults>
</compile_context>

<pallas_src>
import jax
import jax.numpy as jnp
from jax.experimental import pallas as pl
from jax.experimental.pallas import tpu as pltpu


def _round_up(x, m):
    return ((x + m - 1) // m) * m


def _lane_tile(n, tn):
    """Large lane tile, clamped so the grid has >= 2 steps when N allows it
    (v7x has 2 TensorCores; the parallel grid axis is how both get used)."""
    tn = min(tn, _round_up(max(n // 2, 1), 128))
    return max(tn, 128)


def _rbf_kernel(g_ref, d_ref, c_ref, o_ref):
    # Shared body for both layouts — broadcasting does the work:
    #   rows layout:       d (tn, 1) - c (1, bins)  -> (tn, bins)
    #   transposed layout: d (1, tn) - c (bins, 1)  -> (bins, tn)
    gamma = g_ref[0]                       # SMEM scalar (no recompile per gamma)
    diff = d_ref[...] - c_ref[...]
    o_ref[...] = jnp.exp(diff * diff * (-gamma)).astype(o_ref.dtype)


def rbf_expansion(distance, centers, gamma, *, tn=32768,
                  out_dtype=jnp.float32, transposed=False):
    """Pallas forward of RBFExpansion.

    distance : (N,)    float
    centers  : (bins,) float
    returns  : (N, bins)  (torch contract)             if transposed=False
               (bins, N)  lane-dense slab, zero-copy   if transposed=True
    equal to exp(-gamma * (distance[:, None] - centers[None, :])**2).
    """
    n = distance.shape[0]
    bins = centers.shape[0]
    tn = _lane_tile(n, tn)
    grid = (pl.cdiv(n, tn),)

    g = jnp.asarray([gamma], dtype=jnp.float32)
    d = distance.astype(jnp.float32)
    c = centers.astype(jnp.float32)

    cost = pl.CostEstimate(
        flops=3 * n * bins,
        transcendentals=n * bins,
        bytes_accessed=(n * bins + n + bins) * 4,
    )
    smem_spec = pl.BlockSpec(memory_space=pltpu.MemorySpace.SMEM)
    cparams = pltpu.CompilerParams(dimension_semantics=("parallel",))

    if transposed:
        # Review's preferred layout when the consumer can adapt: every store
        # is a full-width lane-dense vst, and there is no follow-up transpose.
        return pl.pallas_call(
            _rbf_kernel,
            out_shape=jax.ShapeDtypeStruct((bins, n), out_dtype),
            grid=grid,
            in_specs=[smem_spec,
                      pl.BlockSpec((1, tn), lambda i: (0, i)),     # distances
                      pl.BlockSpec((bins, 1), lambda i: (0, 0))],  # centers (resident)
            out_specs=pl.BlockSpec((bins, tn), lambda i: (0, i)),
            compiler_params=cparams,
            cost_estimate=cost,
        )(g, d.reshape(1, n), c.reshape(bins, 1))

    # torch contract (N, bins) written directly: a single 1x-write HBM pass.
    # Stores are lane-masked (bins=40 < 128) but that still beats the v2
    # lane-dense kernel + XLA transpose (which re-read and re-wrote the whole
    # output, ~3x total HBM traffic).
    return pl.pallas_call(
        _rbf_kernel,
        out_shape=jax.ShapeDtypeStruct((n, bins), out_dtype),
        grid=grid,
        in_specs=[smem_spec,
                  pl.BlockSpec((tn, 1), lambda i: (i, 0)),      # distances
                  pl.BlockSpec((1, bins), lambda i: (0, 0))],   # centers (resident)
        out_specs=pl.BlockSpec((tn, bins), lambda i: (i, 0)),
        compiler_params=cparams,
        cost_estimate=cost,
    )(g, d.reshape(n, 1), c.reshape(1, bins))


def _rbf_linear_kernel(g_ref, d_ref, c_ref, w_ref, b_ref, o_ref):
    gamma = g_ref[0]
    diff = d_ref[...] - c_ref[...]                       # (tn, bins)
    r = jnp.exp(diff * diff * (-gamma))                  # stays in VMEM / vregs
    o_ref[...] = (jnp.dot(r, w_ref[...], preferred_element_type=jnp.float32)
                  + b_ref[...]).astype(o_ref.dtype)


def rbf_linear(distance, centers, gamma, weight, bias, *, tn=4096,
               out_dtype=jnp.float32):
    """Fused RBFExpansion + Linear(bins -> D): exp(-g*(d-c)^2) @ W + b.

    The (N, bins) intermediate never reaches HBM (review's top structural
    recommendation).  weight: (bins, D), bias: (D,).  Returns (N, D).
    """
    n = distance.shape[0]
    bins = centers.shape[0]
    d_out = weight.shape[1]
    tn = _lane_tile(n, tn)
    grid = (pl.cdiv(n, tn),)

    g = jnp.asarray([gamma], dtype=jnp.float32)
    d = distance.astype(jnp.float32).reshape(n, 1)
    c = centers.astype(jnp.float32).reshape(1, bins)
    w = weight.astype(jnp.float32)
    b = bias.astype(jnp.float32).reshape(1, d_out)

    cost = pl.CostEstimate(
        flops=3 * n * bins + 2 * n * bins * d_out,
        transcendentals=n * bins,
        bytes_accessed=(n + bins + bins * d_out + d_out + n * d_out) * 4,
    )
    return pl.pallas_call(
        _rbf_linear_kernel,
        out_shape=jax.ShapeDtypeStruct((n, d_out), out_dtype),
        grid=grid,
        in_specs=[pl.BlockSpec(memory_space=pltpu.MemorySpace.SMEM),  # gamma
                  pl.BlockSpec((tn, 1), lambda i: (i, 0)),            # distances
                  pl.BlockSpec((1, bins), lambda i: (0, 0)),          # centers
                  pl.BlockSpec((bins, d_out), lambda i: (0, 0)),      # W (resident)
                  pl.BlockSpec((1, d_out), lambda i: (0, 0))],        # bias (resident)
        out_specs=pl.BlockSpec((tn, d_out), lambda i: (i, 0)),
        compiler_params=pltpu.CompilerParams(dimension_semantics=("parallel",)),
        cost_estimate=cost,
    )(g, d, c, w, b)


def make_rbf_params(vmin=0.0, vmax=8.0, bins=40, lengthscale=None):
    """Deterministic parameter setup mirroring RBFExpansion.__init__.

    Note: keeps the original module's asymmetric gamma definition
    (1/lengthscale when auto-derived, 1/lengthscale**2 when given) on purpose,
    to match the torch reference exactly."""
    centers = jnp.linspace(vmin, vmax, bins, dtype=jnp.float32)
    if lengthscale is None:
        lengthscale = float(jnp.mean(jnp.diff(centers)))
        gamma = 1.0 / lengthscale
    else:
        gamma = 1.0 / lengthscale ** 2
    return centers, gamma


if __name__ == "__main__":
    key = jax.random.PRNGKey(0)
    N, BINS, D = 300, 40, 64          # N not a multiple of the lane tile

    centers, gamma = make_rbf_params(vmin=0.0, vmax=8.0, bins=BINS)
    k_d, k_w, k_b = jax.random.split(key, 3)
    distance = jax.random.uniform(k_d, (N,), dtype=jnp.float32,
                                  minval=0.0, maxval=8.0)

    # Reference (same math as the torch forward).
    ref = jnp.exp(-gamma * (distance[:, None] - centers[None, :]) ** 2)

    # 1) torch-contract (N, bins), written in a single pass (no XLA transpose).
    out = jax.block_until_ready(rbf_expansion(distance, centers, gamma))
    assert out.shape == (N, BINS)
    assert jnp.allclose(out, ref, atol=1e-5, rtol=1e-5)

    # 2) lane-dense (bins, N) slab for consumers that can adapt (review #1).
    out_t = jax.block_until_ready(
        rbf_expansion(distance, centers, gamma, transposed=True))
    assert out_t.shape == (BINS, N)
    assert jnp.allclose(out_t, ref.T, atol=1e-5, rtol=1e-5)

    # 3) fused RBF + Linear (review #2): the (N, bins) tensor never hits HBM.
    weight = 0.1 * jax.random.normal(k_w, (BINS, D), dtype=jnp.float32)
    bias = 0.1 * jax.random.normal(k_b, (D,), dtype=jnp.float32)
    out_lin = jax.block_until_ready(
        rbf_linear(distance, centers, gamma, weight, bias))
    ref_lin = jnp.dot(ref, weight, precision=jax.lax.Precision.HIGHEST) + bias
    assert out_lin.shape == (N, D)
    assert jnp.allclose(out_lin, ref_lin, atol=5e-3, rtol=5e-3)

    print("KERNEL_OK")
</pallas_src>

<mosaic_0001>
module attributes {stable_mosaic.version = 11 : i64} {
  func.func @_rbf_kernel(%arg0: i32, %arg1: memref<1xf32, #tpu.memory_space<smem>>, %arg2: memref<256x1xf32, #tpu.memory_space<vmem>>, %arg3: memref<1x40xf32, #tpu.memory_space<vmem>>, %arg4: memref<256x40xf32, #tpu.memory_space<vmem>>) attributes {dimension_semantics = [#tpu.dimension_semantics<parallel>], iteration_bounds = array<i64: 2>, scalar_prefetch = 0 : i64, scratch_operands = 0 : i64, tpu.core_type = #tpu.core_type<tc>, window_params = [{transform_indices = @transform_0, window_bounds = array<i64: 1>}, {transform_indices = @transform_1, window_bounds = array<i64: 256, 1>}, {pipeline_mode = #tpu.pipeline_mode<synchronous>, transform_indices = @transform_2, window_bounds = array<i64: 1, 40>}, {transform_indices = @transform_3, window_bounds = array<i64: 256, 40>}]} {
    %c0 = arith.constant 0 : index
    %0 = memref.load %arg1[%c0] : memref<1xf32, #tpu.memory_space<smem>>
    %c0_0 = arith.constant 0 : index
    %c0_1 = arith.constant 0 : index
    %1 = vector.load %arg2[%c0_0, %c0_1] : memref<256x1xf32, #tpu.memory_space<vmem>>, vector<256x1xf32>
    %c0_2 = arith.constant 0 : index
    %c0_3 = arith.constant 0 : index
    %2 = vector.load %arg3[%c0_2, %c0_3] : memref<1x40xf32, #tpu.memory_space<vmem>>, vector<1x40xf32>
    %3 = vector.broadcast %1 : vector<256x1xf32> to vector<256x40xf32>
    %4 = vector.broadcast %2 : vector<1x40xf32> to vector<256x40xf32>
    %5 = arith.subf %3, %4 : vector<256x40xf32>
    %6 = arith.mulf %5, %5 : vector<256x40xf32>
    %cst = arith.constant 0.000000e+00 : f32
    %7 = arith.subf %cst, %0 : f32
    %8 = vector.broadcast %7 : f32 to vector<256x40xf32>
    %9 = arith.mulf %6, %8 : vector<256x40xf32>
    %10 = math.exp %9 : vector<256x40xf32>
    %c0_4 = arith.constant 0 : index
    %c0_5 = arith.constant 0 : index
    %11 = vector.load %arg4[%c0_4, %c0_5] : memref<256x40xf32, #tpu.memory_space<vmem>>, vector<256x40xf32>
    tpu.vector_store %arg4[%c0_4, %c0_5], %10 {strides = array<i32>} : memref<256x40xf32, #tpu.memory_space<vmem>>, vector<256x40xf32>,
    return
  }
  func.func @transform_0(%arg0: i32) -> i32 {
    %c0_i32 = arith.constant 0 : i32
    %c0_i32_0 = arith.constant 0 : i32
    return %c0_i32 : i32
  }
  func.func @transform_1(%arg0: i32) -> (i32, i32) {
    %c0_i32 = arith.constant 0 : i32
    %c0_i32_0 = arith.constant 0 : i32
    return %arg0, %c0_i32 : i32, i32
  }
  func.func @transform_2(%arg0: i32) -> (i32, i32) {
    %c0_i32 = arith.constant 0 : i32
    %c0_i32_0 = arith.constant 0 : i32
    %c0_i32_1 = arith.constant 0 : i32
    return %c0_i32, %c0_i32_0 : i32, i32
  }
  func.func @transform_3(%arg0: i32) -> (i32, i32) {
    %c0_i32 = arith.constant 0 : i32
    %c0_i32_0 = arith.constant 0 : i32
    return %arg0, %c0_i32 : i32, i32
  }
}

</mosaic_0001>

<llo_original>
// kernel: tpu_custom_call.1
$region0: #{tpu_custom_call.1}
  #allocation0 [shape = 'u32[]', space=smem, size = 0x4, offset = 0x4, fixed_abs, tag = 'smem constant byte address 0x4 - core index']
  #allocation1 [shape = 'u32[72,128]{1,0:T(1,128)}', space=vmem, size = 0x9000, scoped, tag = 'internal scratch']
  #allocation2 [shape = 'f32[1]{0:T(128)S(6)}', space=smem, size = 0x200, scoped, tag = 'scoped memory for tpu_custom_call.1']
  %s0 = inlined_call_operand.<no memory space> [shape: f32[1], index: 0, kind: input, shape index: {}]
  %s1 = inlined_call_operand.vmem [shape: f32[300,1], index: 1, kind: input, shape index: {}]
  %s2 = inlined_call_operand.vmem [shape: f32[1,40], index: 2, kind: input, shape index: {}]
  %s3 = inlined_call_operand.vmem [shape: f32[300,40], index: 3, kind: output, shape index: {}]
  %s4 = sld [smem:[#allocation0]]
  $region93: #{tpu_custom_call.1} parent=0
    _
  %s6 = ssub.s32 1, %s4
  %s7 = scalar_select 0, %s6, %s4
  %8 = sst [smem:[#allocation2]] %s0
  $region1: #{tpu_custom_call.1} parent=0
    #allocation3 [shape = 'u8[262144]{0}', space=vmem, size = 0x40000, scoped, tag = 'output window, operand 0']
    loop: start=0, step=1, limit=4
    $region2: #{tpu_custom_call.1} parent=1 // loop_pre_header
      _
    $region3: #{tpu_custom_call.1} parent=1 // loop_header
      %s10 = sphi 0, %s14
      %p11 = scmp.ge.s32.totalorder %s10, 4
      %s18 = sphi 0, %s18
      %s20 = sphi 0, %s18
      %s21 = sphi 0, %s20
      %s35 = sphi 0, %s21
      %s41 = sphi 0, %s43
      %s44 = sphi 0, %s41
      %s45 = sphi 0, %s44
      %s61 = sphi 0, %s45
      %s65 = sphi 0, %s65
      %s67 = sphi 0, %s65
      %s68 = sphi 0, %s67
      %s82 = sphi 0, %s68
      %s88 = sphi 0, %s90
      %s91 = sphi 0, %s88
      %s92 = sphi 0, %s91
      %s108 = sphi 0, %s92
    $region4: #{tpu_custom_call.1} parent=1 // loop_header_branch
      %13 = sbr.rel (%p11) target = $region8
    $region5: #{tpu_custom_call.1} parent=1 // loop_body
      %s15 = ssub.s32 %s10, 1
      %s16 = ssub.s32 %s10, 2
      %s17 = sadd.s32 %s10, 1
      %s19 = sadd.s32 %s18, 1
      %p22 = scmp.eq.s32.totalorder %s10, 1
      %p23 = scmp.ne.s32.totalorder %s18, %s20
      %p24 = scmp.eq.s32.totalorder %s10, 0
      %p25 = por %p23, %p24
      %p26 = scmp.ne.s32.totalorder %s18, %s20
      %p27 = scmp.eq.s32.totalorder %s15, 1
      %p28 = por %p26, %p27
      %p29 = scmp.ne.s32.totalorder %s20, %s21
      %p30 = scmp.eq.s32.totalorder %s15, 0
      %p31 = por %p29, %p30
      %p32 = scmp.ne.s32.totalorder %s20, %s21
      %p33 = scmp.eq.s32.totalorder %s16, 1
      %p34 = por %p32, %p33
      %p36 = scmp.ne.s32.totalorder %s21, %s35
      %p37 = scmp.eq.s32.totalorder %s16, 0
      %p38 = por %p36, %p37
      %s39 = ssub.s32 %s10, %s17
      %p40 = scmp.eq.s32.totalorder %s39, 0
      %s42 = sadd.s32 %s41, 1
      %s43 = scalar_select %p40, %s41, %s42
      %p46 = pneg %p40
      %p47 = scmp.eq.s32.totalorder %s10, 1
      %p48 = por %p46, %p47
      %p49 = scmp.ne.s32.totalorder %s41, %s44
      %p50 = scmp.eq.s32.totalorder %s10, 0
      %p51 = por %p49, %p50
      %p52 = scmp.ne.s32.totalorder %s41, %s44
      %p53 = scmp.eq.s32.totalorder %s15, 1
      %p54 = por %p52, %p53
      %p55 = scmp.ne.s32.totalorder %s44, %s45
      %p56 = scmp.eq.s32.totalorder %s15, 0
      %p57 = por %p55, %p56
      %p58 = scmp.ne.s32.totalorder %s44, %s45
      %p59 = scmp.eq.s32.totalorder %s16, 1
      %p60 = por %p58, %p59
      %p62 = scmp.ne.s32.totalorder %s45, %s61
      %p63 = scmp.eq.s32.totalorder %s16, 0
      %p64 = por %p62, %p63
      %s66 = sadd.s32 %s65, 1
      %p69 = scmp.eq.s32.totalorder %s10, 1
      %p70 = scmp.ne.s32.totalorder %s65, %s67
      %p71 = scmp.eq.s32.totalorder %s10, 0
      %p72 = por %p70, %p71
      %p73 = scmp.ne.s32.totalorder %s65, %s67
      %p74 = scmp.eq.s32.totalorder %s15, 1
      %p75 = por %p73, %p74
      %p76 = scmp.ne.s32.totalorder %s67, %s68
      %p77 = scmp.eq.s32.totalorder %s15, 0
      %p78 = por %p76, %p77
      %p79 = scmp.ne.s32.totalorder %s67, %s68
      %p80 = scmp.eq.s32.totalorder %s16, 1
      %p81 = por %p79, %p80
      %p83 = scmp.ne.s32.totalorder %s68, %s82
      %p84 = scmp.eq.s32.totalorder %s16, 0
      %p85 = por %p83, %p84
      %s86 = ssub.s32 %s10, %s17
      %p87 = scmp.eq.s32.totalorder %s86, 0
      %s89 = sadd.s32 %s88, 1
      %s90 = scalar_select %p87, %s88, %s89
      %p93 = pneg %p87
      %p94 = scmp.eq.s32.totalorder %s10, 1
      %p95 = por %p93, %p94
      %p96 = scmp.ne.s32.totalorder %s88, %s91
      %p97 = scmp.eq.s32.totalorder %s10, 0
      %p98 = por %p96, %p97
      %p99 = scmp.ne.s32.totalorder %s88, %s91
      %p100 = scmp.eq.s32.totalorder %s15, 1
      %p101 = por %p99, %p100
      %p102 = scmp.ne.s32.totalorder %s91, %s92
      %p103 = scmp.eq.s32.totalorder %s15, 0
      %p104 = por %p102, %p103
      %p105 = scmp.ne.s32.totalorder %s91, %s92
      %p106 = scmp.eq.s32.totalorder %s16, 1
      %p107 = por %p105, %p106
      %p109 = scmp.ne.s32.totalorder %s92, %s108
      %p110 = scmp.eq.s32.totalorder %s16, 0
      %p111 = por %p109, %p110
      %p112 = scmp.le.s32.totalorder 1, %s10
      %p113 = scmp.lt.s32.totalorder %s10, 3
      %p114 = pnand %p112, %p113
      %p115 = pneg %p114
      // Predicated region
      $region9: #{tpu_custom_call.1} parent=5 // pred_check
        _
      $region10: #{tpu_custom_call.1} parent=5 // pred_check_branch
        %117 = sbr.rel (%p114) target = $region12
      $region11: #{tpu_custom_call.1} parent=5 // pred_region
        %s118 = ssub.s32 %s10, 1
        // Predicated region
        $region13: #{tpu_custom_call.1} parent=11 // pred_check
          %p119 = pneg %p31
        $region14: #{tpu_custom_call.1} parent=11 // pred_check_branch
          %121 = sbr.rel (%p119) target = $region16
        $region15: #{tpu_custom_call.1} parent=11 // pred_region
          _
        $region16: #{tpu_custom_call.1} parent=11 // pred_fallthru
          _
        // Predicated region
        $region17: #{tpu_custom_call.1} parent=11 // pred_check
          %p122 = pneg %p78
        $region18: #{tpu_custom_call.1} parent=11 // pred_check_branch
          %124 = sbr.rel (%p122) target = $region20
        $region19: #{tpu_custom_call.1} parent=11 // pred_region
          _
        $region20: #{tpu_custom_call.1} parent=11 // pred_fallthru
          _
      $region12: #{tpu_custom_call.1} parent=5 // pred_fallthru
        _
      %p125 = scmp.lt.s32.totalorder %s10, 2
      // Predicated region
      $region21: #{tpu_custom_call.1} parent=5 // pred_check
        %p126 = pneg %p125
      $region22: #{tpu_custom_call.1} parent=5 // pred_check_branch
        %128 = sbr.rel (%p126) target = $region24
      $region23: #{tpu_custom_call.1} parent=5 // pred_region
        // Predicated region
        $region25: #{tpu_custom_call.1} parent=23 // pred_check
          %p129 = pneg %p51
        $region26: #{tpu_custom_call.1} parent=23 // pred_check_branch
          %131 = sbr.rel (%p129) target = $region28
        $region27: #{tpu_custom_call.1} parent=23 // pred_region
          %s132 = smul.u32 32, %s10
          %s133 = ssub.s32 38, %s132
          %p134 = scmp.lt.s32.totalorder %s133, 32
          %s135 = scalar_select %p134, %s133, 32
          %s136 = smul.u32 8, %s135
          %p137 = scmp.lt.s32.totalorder %s132, 37
          %s138 = scalar_select %p137, %s132, 37
          %s139 = smul.addr %s138, 8
          %s140 = scalar_lea.vmem %s1, %s139
          %s141 = smul.u32 32, %s10
          %s142 = ssub.s32 38, %s141
          %p143 = scmp.lt.s32.totalorder %s142, 32
          %s144 = scalar_select %p143, %s142, 32
          %s145 = smul.u32 8, %s144
        $region28: #{tpu_custom_call.1} parent=23 // pred_fallthru
          _
      $region24: #{tpu_custom_call.1} parent=5 // pred_fallthru
        _
      %p146 = scmp.le.s32.totalorder 1, %s10
      %p147 = scmp.lt.s32.totalorder %s10, 3
      %p148 = pnand %p146, %p147
      %p149 = pneg %p148
      // Predicated region
      $region29: #{tpu_custom_call.1} parent=5 // pred_check
        _
      $region30: #{tpu_custom_call.1} parent=5 // pred_check_branch
        %151 = sbr.rel (%p148) target = $region32
      $region31: #{tpu_custom_call.1} parent=5 // pred_region
        %s152 = ssub.s32 %s10, 1
        %p153 = pneg %p31
        %p154 = pneg %p28
        %s155 = smul.u32 32, %s15
        %s156 = ssub.s32 38, %s155
        %p157 = scmp.lt.s32.totalorder %s156, 32
        %s158 = scalar_select %p157, %s156, 32
        %s159 = smul.u32 8, %s158
        %p160 = scmp.lt.s32.totalorder %s155, 37
        %s161 = scalar_select %p160, %s155, 37
        %s162 = smul.addr %s161, 8
        %s163 = scalar_lea.vmem %s1, %s162
        %p164 = pneg %p57
        %p165 = pneg %p54
        %p166 = pneg %p78
        %p167 = pneg %p75
        %p168 = pneg %p104
        %p169 = pneg %p101
        %s170 = sand.u32 %s91, 1
        %s171 = sand.u32 %s91, 1
        %s172 = smul.addr %s171, 256
        %s173 = scalar_lea.vmem [#allocation3], %s172
        %s174 = smul.u32 32, %s15
        %s175 = ssub.s32 38, %s174
        %p176 = scmp.lt.s32.totalorder %s175, 32
        %s177 = scalar_select %p176, %s175, 32
        %s178 = smul.u32 8, %s177
        %p179 = scmp.lt.s32.totalorder %s174, 37
        %s180 = scalar_select %p179, %s174, 37
        %s181 = smul.addr %s180, 8
        %s182 = scalar_lea.vmem %s1, %s181
        %s183 = smul.u32 32, %s15
        %s184 = ssub.s32 38, %s183
        %p185 = scmp.lt.s32.totalorder %s184, 32
        %s186 = scalar_select %p185, %s184, 32
        %s187 = smul.u32 8, %s186
        %s188 = smul.u32 32, %s15
        %s189 = ssub.s32 38, %s188
        %p190 = scmp.lt.s32.totalorder %s189, 32
        %s191 = scalar_select %p190, %s189, 32
        %s192 = smul.u32 8, %s191
        %s193 = sld [smem:[#allocation2]]
        %v194 = vld [vmem:[%s182] sm:$0xff]
        %v195 = vld [vmem:[%s182 + $0x8] sm:$0xff]
        %v196 = vld [vmem:[%s182 + $0x10] sm:$0xff]
        %v197 = vld [vmem:[%s182 + $0x18] sm:$0xff]
        %v198 = vld [vmem:[%s182 + $0x20] sm:$0xff]
        %v199 = vld [vmem:[%s182 + $0x28] sm:$0xff]
        %v200 = vld [vmem:[%s182 + $0x30] sm:$0xff]
        %v201 = vld [vmem:[%s182 + $0x38] sm:$0xff]
        %v202 = vld [vmem:[%s182 + $0x40] sm:$0xff]
        %v203 = vld [vmem:[%s182 + $0x48] sm:$0xff]
        %v204 = vld [vmem:[%s182 + $0x50] sm:$0xff]
        %v205 = vld [vmem:[%s182 + $0x58] sm:$0xff]
        %v206 = vld [vmem:[%s182 + $0x60] sm:$0xff]
        %v207 = vld [vmem:[%s182 + $0x68] sm:$0xff]
        %v208 = vld [vmem:[%s182 + $0x70] sm:$0xff]
        %v209 = vld [vmem:[%s182 + $0x78] sm:$0xff]
        %v210 = vld [vmem:[%s182 + $0x80] sm:$0xff]
        %v211 = vld [vmem:[%s182 + $0x88] sm:$0xff]
        %v212 = vld [vmem:[%s182 + $0x90] sm:$0xff]
        %v213 = vld [vmem:[%s182 + $0x98] sm:$0xff]
        %v214 = vld [vmem:[%s182 + $0xa0] sm:$0xff]
        %v215 = vld [vmem:[%s182 + $0xa8] sm:$0xff]
        %v216 = vld [vmem:[%s182 + $0xb0] sm:$0xff]
        %v217 = vld [vmem:[%s182 + $0xb8] sm:$0xff]
        %v218 = vld [vmem:[%s182 + $0xc0] sm:$0xff]
        %v219 = vld [vmem:[%s182 + $0xc8] sm:$0xff]
        %v220 = vld [vmem:[%s182 + $0xd0] sm:$0xff]
        %v221 = vld [vmem:[%s182 + $0xd8] sm:$0xff]
        %v222 = vld [vmem:[%s182 + $0xe0] sm:$0xff]
        %v223 = vld [vmem:[%s182 + $0xe8] sm:$0xff]
        %v224 = vld [vmem:[%s182 + $0xf0] sm:$0xff]
        %v225 = vld [vmem:[%s182 + $0xf8] sm:$0xff]
        %v226 = vld [vmem:[%s2] sm:$0x1]
        %228 = vset.pattern.permute.xlu0 0
        %229 = vperm.xlu0 %228, %v194
        %v230 = vpop.permute.xlu0 %229
        %233 = vset.pattern.permute.xlu0 0
        %234 = vperm.xlu0 %233, %v195
        %v235 = vpop.permute.xlu0 %234
        %238 = vset.pattern.permute.xlu0 0
        %239 = vperm.xlu0 %238, %v196
        %v240 = vpop.permute.xlu0 %239
        %243 = vset.pattern.permute.xlu0 0
        %244 = vperm.xlu0 %243, %v197
        %v245 = vpop.permute.xlu0 %244
        %248 = vset.pattern.permute.xlu0 0
        %249 = vperm.xlu0 %248, %v198
        %v250 = vpop.permute.xlu0 %249
        %253 = vset.pattern.permute.xlu0 0
        %254 = vperm.xlu0 %253, %v199
        %v255 = vpop.permute.xlu0 %254
        %258 = vset.pattern.permute.xlu0 0
        %259 = vperm.xlu0 %258, %v200
        %v260 = vpop.permute.xlu0 %259
        %263 = vset.pattern.permute.xlu0 0
        %264 = vperm.xlu0 %263, %v201
        %v265 = vpop.permute.xlu0 %264
        %268 = vset.pattern.permute.xlu0 0
        %269 = vperm.xlu0 %268, %v202
        %v270 = vpop.permute.xlu0 %269
        %273 = vset.pattern.permute.xlu0 0
        %274 = vperm.xlu0 %273, %v203
        %v275 = vpop.permute.xlu0 %274
        %278 = vset.pattern.permute.xlu0 0
        %279 = vperm.xlu0 %278, %v204
        %v280 = vpop.permute.xlu0 %279
        %283 = vset.pattern.permute.xlu0 0
        %284 = vperm.xlu0 %283, %v205
        %v285 = vpop.permute.xlu0 %284
        %288 = vset.pattern.permute.xlu0 0
        %289 = vperm.xlu0 %288, %v206
        %v290 = vpop.permute.xlu0 %289
        %293 = vset.pattern.permute.xlu0 0
        %294 = vperm.xlu0 %293, %v207
        %v295 = vpop.permute.xlu0 %294
        %298 = vset.pattern.permute.xlu0 0
        %299 = vperm.xlu0 %298, %v208
        %v300 = vpop.permute.xlu0 %299
        %303 = vset.pattern.permute.xlu0 0
        %304 = vperm.xlu0 %303, %v209
        %v305 = vpop.permute.xlu0 %304
        %308 = vset.pattern.permute.xlu0 0
        %309 = vperm.xlu0 %308, %v210
        %v310 = vpop.permute.xlu0 %309
        %313 = vset.pattern.permute.xlu0 0
        %314 = vperm.xlu0 %313, %v211
        %v315 = vpop.permute.xlu0 %314
        %318 = vset.pattern.permute.xlu0 0
        %319 = vperm.xlu0 %318, %v212
        %v320 = vpop.permute.xlu0 %319
        %323 = vset.pattern.permute.xlu0 0
        %324 = vperm.xlu0 %323, %v213
        %v325 = vpop.permute.xlu0 %324
        %328 = vset.pattern.permute.xlu0 0
        %329 = vperm.xlu0 %328, %v214
        %v330 = vpop.permute.xlu0 %329
        %333 = vset.pattern.permute.xlu0 0
        %334 = vperm.xlu0 %333, %v215
        %v335 = vpop.permute.xlu0 %334
        %338 = vset.pattern.permute.xlu0 0
        %339 = vperm.xlu0 %338, %v216
        %v340 = vpop.permute.xlu0 %339
        %343 = vset.pattern.permute.xlu0 0
        %344 = vperm.xlu0 %343, %v217
        %v345 = vpop.permute.xlu0 %344
        %348 = vset.pattern.permute.xlu0 0
        %349 = vperm.xlu0 %348, %v218
        %v350 = vpop.permute.xlu0 %349
        %353 = vset.pattern.permute.xlu0 0
        %354 = vperm.xlu0 %353, %v219
        %v355 = vpop.permute.xlu0 %354
        %358 = vset.pattern.permute.xlu0 0
        %359 = vperm.xlu0 %358, %v220
        %v360 = vpop.permute.xlu0 %359
        %363 = vset.pattern.permute.xlu0 0
        %364 = vperm.xlu0 %363, %v221
        %v365 = vpop.permute.xlu0 %364
        %368 = vset.pattern.permute.xlu0 0
        %369 = vperm.xlu0 %368, %v222
        %v370 = vpop.permute.xlu0 %369
        %373 = vset.pattern.permute.xlu0 0
        %374 = vperm.xlu0 %373, %v223
        %v375 = vpop.permute.xlu0 %374
        %378 = vset.pattern.permute.xlu0 0
        %379 = vperm.xlu0 %378, %v224
        %v380 = vpop.permute.xlu0 %379
        %383 = vset.pattern.permute.xlu0 0
        %384 = vperm.xlu0 %383, %v225
        %v385 = vpop.permute.xlu0 %384
        %v388 = vperm.slane %v226, 0
        %v390 = vsub.f32 %v230, %v388
        %v391 = vsub.f32 %v235, %v388
        %v392 = vsub.f32 %v240, %v388
        %v393 = vsub.f32 %v245, %v388
        %v394 = vsub.f32 %v250, %v388
        %v395 = vsub.f32 %v255, %v388
        %v396 = vsub.f32 %v260, %v388
        %v397 = vsub.f32 %v265, %v388
        %v398 = vsub.f32 %v270, %v388
        %v399 = vsub.f32 %v275, %v388
        %v400 = vsub.f32 %v280, %v388
        %v401 = vsub.f32 %v285, %v388
        %v402 = vsub.f32 %v290, %v388
        %v403 = vsub.f32 %v295, %v388
        %v404 = vsub.f32 %v300, %v388
        %v405 = vsub.f32 %v305, %v388
        %v406 = vsub.f32 %v310, %v388
        %v407 = vsub.f32 %v315, %v388
        %v408 = vsub.f32 %v320, %v388
        %v409 = vsub.f32 %v325, %v388
        %v410 = vsub.f32 %v330, %v388
        %v411 = vsub.f32 %v335, %v388
        %v412 = vsub.f32 %v340, %v388
        %v413 = vsub.f32 %v345, %v388
        %v414 = vsub.f32 %v350, %v388
        %v415 = vsub.f32 %v355, %v388
        %v416 = vsub.f32 %v360, %v388
        %v417 = vsub.f32 %v365, %v388
        %v418 = vsub.f32 %v370, %v388
        %v419 = vsub.f32 %v375, %v388
        %v420 = vsub.f32 %v380, %v388
        %v421 = vsub.f32 %v385, %v388
        %v422 = vmul.f32 %v390, %v390
        %v423 = vmul.f32 %v391, %v391
        %v424 = vmul.f32 %v392, %v392
        %v425 = vmul.f32 %v393, %v393
        %v426 = vmul.f32 %v394, %v394
        %v427 = vmul.f32 %v395, %v395
        %v428 = vmul.f32 %v396, %v396
        %v429 = vmul.f32 %v397, %v397
        %v430 = vmul.f32 %v398, %v398
        %v431 = vmul.f32 %v399, %v399
        %v432 = vmul.f32 %v400, %v400
        %v433 = vmul.f32 %v401, %v401
        %v434 = vmul.f32 %v402, %v402
        %v435 = vmul.f32 %v403, %v403
        %v436 = vmul.f32 %v404, %v404
        %v437 = vmul.f32 %v405, %v405
        %v438 = vmul.f32 %v406, %v406
        %v439 = vmul.f32 %v407, %v407
        %v440 = vmul.f32 %v408, %v408
        %v441 = vmul.f32 %v409, %v409
        %v442 = vmul.f32 %v410, %v410
        %v443 = vmul.f32 %v411, %v411
        %v444 = vmul.f32 %v412, %v412
        %v445 = vmul.f32 %v413, %v413
        %v446 = vmul.f32 %v414, %v414
        %v447 = vmul.f32 %v415, %v415
        %v448 = vmul.f32 %v416, %v416
        %v449 = vmul.f32 %v417, %v417
        %v450 = vmul.f32 %v418, %v418
        %v451 = vmul.f32 %v419, %v419
        %v452 = vmul.f32 %v420, %v420
        %v453 = vmul.f32 %v421, %v421
        %s454 = ssub.f32 0.0, %s193
        %v455 = vstv %s454
        %v456 = vmul.f32 %v422, %v455
        %v457 = vmul.f32 %v423, %v455
        %v458 = vmul.f32 %v424, %v455
        %v459 = vmul.f32 %v425, %v455
        %v460 = vmul.f32 %v426, %v455
        %v461 = vmul.f32 %v427, %v455
        %v462 = vmul.f32 %v428, %v455
        %v463 = vmul.f32 %v429, %v455
        %v464 = vmul.f32 %v430, %v455
        %v465 = vmul.f32 %v431, %v455
        %v466 = vmul.f32 %v432, %v455
        %v467 = vmul.f32 %v433, %v455
        %v468 = vmul.f32 %v434, %v455
        %v469 = vmul.f32 %v435, %v455
        %v470 = vmul.f32 %v436, %v455
        %v471 = vmul.f32 %v437, %v455
        %v472 = vmul.f32 %v438, %v455
        %v473 = vmul.f32 %v439, %v455
        %v474 = vmul.f32 %v440, %v455
        %v475 = vmul.f32 %v441, %v455
        %v476 = vmul.f32 %v442, %v455
        %v477 = vmul.f32 %v443, %v455
        %v478 = vmul.f32 %v444, %v455
        %v479 = vmul.f32 %v445, %v455
        %v480 = vmul.f32 %v446, %v455
        %v481 = vmul.f32 %v447, %v455
        %v482 = vmul.f32 %v448, %v455
        %v483 = vmul.f32 %v449, %v455
        %v484 = vmul.f32 %v450, %v455
        %v485 = vmul.f32 %v451, %v455
        %v486 = vmul.f32 %v452, %v455
        %v487 = vmul.f32 %v453, %v455
        %v488 = vmul.f32 %v456, 1.442695
        %v489 = vpow.pop %v488
        %v490 = vmul.f32 %v457, 1.442695
        %v491 = vpow.pop %v490
        %v492 = vmul.f32 %v458, 1.442695
        %v493 = vpow.pop %v492
        %v494 = vmul.f32 %v459, 1.442695
        %v495 = vpow.pop %v494
        %v496 = vmul.f32 %v460, 1.442695
        %v497 = vpow.pop %v496
        %v498 = vmul.f32 %v461, 1.442695
        %v499 = vpow.pop %v498
        %v500 = vmul.f32 %v462, 1.442695
        %v501 = vpow.pop %v500
        %v502 = vmul.f32 %v463, 1.442695
        %v503 = vpow.pop %v502
        %v504 = vmul.f32 %v464, 1.442695
        %v505 = vpow.pop %v504
        %v506 = vmul.f32 %v465, 1.442695
        %v507 = vpow.pop %v506
        %v508 = vmul.f32 %v466, 1.442695
        %v509 = vpow.pop %v508
        %v510 = vmul.f32 %v467, 1.442695
        %v511 = vpow.pop %v510
        %v512 = vmul.f32 %v468, 1.442695
        %v513 = vpow.pop %v512
        %v514 = vmul.f32 %v469, 1.442695
        %v515 = vpow.pop %v514
        %v516 = vmul.f32 %v470, 1.442695
        %v517 = vpow.pop %v516
        %v518 = vmul.f32 %v471, 1.442695
        %v519 = vpow.pop %v518
        %v520 = vmul.f32 %v472, 1.442695
        %v521 = vpow.pop %v520
        %v522 = vmul.f32 %v473, 1.442695
        %v523 = vpow.pop %v522
        %v524 = vmul.f32 %v474, 1.442695
        %v525 = vpow.pop %v524
        %v526 = vmul.f32 %v475, 1.442695
        %v527 = vpow.pop %v526
        %v528 = vmul.f32 %v476, 1.442695
        %v529 = vpow.pop %v528
        %v530 = vmul.f32 %v477, 1.442695
        %v531 = vpow.pop %v530
        %v532 = vmul.f32 %v478, 1.442695
        %v533 = vpow.pop %v532
        %v534 = vmul.f32 %v479, 1.442695
        %v535 = vpow.pop %v534
        %v536 = vmul.f32 %v480, 1.442695
        %v537 = vpow.pop %v536
        %v538 = vmul.f32 %v481, 1.442695
        %v539 = vpow.pop %v538
        %v540 = vmul.f32 %v482, 1.442695
        %v541 = vpow.pop %v540
        %v542 = vmul.f32 %v483, 1.442695
        %v543 = vpow.pop %v542
        %v544 = vmul.f32 %v484, 1.442695
        %v545 = vpow.pop %v544
        %v546 = vmul.f32 %v485, 1.442695
        %v547 = vpow.pop %v546
        %v548 = vmul.f32 %v486, 1.442695
        %v549 = vpow.pop %v548
        %v550 = vmul.f32 %v487, 1.442695
        %v551 = vpow.pop %v550
        %vm552 = vcmask 326656
        %553 = vst.msk [vmem:[%s173] sm:$0xff] %vm552, %v489
        %554 = vst.msk [vmem:[%s173 + $0x8] sm:$0xff] %vm552, %v491
        %555 = vst.msk [vmem:[%s173 + $0x10] sm:$0xff] %vm552, %v493
        %556 = vst.msk [vmem:[%s173 + $0x18] sm:$0xff] %vm552, %v495
        %557 = vst.msk [vmem:[%s173 + $0x20] sm:$0xff] %vm552, %v497
        %558 = vst.msk [vmem:[%s173 + $0x28] sm:$0xff] %vm552, %v499
        %559 = vst.msk [vmem:[%s173 + $0x30] sm:$0xff] %vm552, %v501
        %560 = vst.msk [vmem:[%s173 + $0x38] sm:$0xff] %vm552, %v503
        %561 = vst.msk [vmem:[%s173 + $0x40] sm:$0xff] %vm552, %v505
        %562 = vst.msk [vmem:[%s173 + $0x48] sm:$0xff] %vm552, %v507
        %563 = vst.msk [vmem:[%s173 + $0x50] sm:$0xff] %vm552, %v509
        %564 = vst.msk [vmem:[%s173 + $0x58] sm:$0xff] %vm552, %v511
        %565 = vst.msk [vmem:[%s173 + $0x60] sm:$0xff] %vm552, %v513
        %566 = vst.msk [vmem:[%s173 + $0x68] sm:$0xff] %vm552, %v515
        %567 = vst.msk [vmem:[%s173 + $0x70] sm:$0xff] %vm552, %v517
        %568 = vst.msk [vmem:[%s173 + $0x78] sm:$0xff] %vm552, %v519
        %569 = vst.msk [vmem:[%s173 + $0x80] sm:$0xff] %vm552, %v521
        %570 = vst.msk [vmem:[%s173 + $0x88] sm:$0xff] %vm552, %v523
        %571 = vst.msk [vmem:[%s173 + $0x90] sm:$0xff] %vm552, %v525
        %572 = vst.msk [vmem:[%s173 + $0x98] sm:$0xff] %vm552, %v527
        %573 = vst.msk [vmem:[%s173 + $0xa0] sm:$0xff] %vm552, %v529
        %574 = vst.msk [vmem:[%s173 + $0xa8] sm:$0xff] %vm552, %v531
        %575 = vst.msk [vmem:[%s173 + $0xb0] sm:$0xff] %vm552, %v533
        %576 = vst.msk [vmem:[%s173 + $0xb8] sm:$0xff] %vm552, %v535
        %577 = vst.msk [vmem:[%s173 + $0xc0] sm:$0xff] %vm552, %v537
        %578 = vst.msk [vmem:[%s173 + $0xc8] sm:$0xff] %vm552, %v539
        %579 = vst.msk [vmem:[%s173 + $0xd0] sm:$0xff] %vm552, %v541
        %580 = vst.msk [vmem:[%s173 + $0xd8] sm:$0xff] %vm552, %v543
        %581 = vst.msk [vmem:[%s173 + $0xe0] sm:$0xff] %vm552, %v545
        %582 = vst.msk [vmem:[%s173 + $0xe8] sm:$0xff] %vm552, %v547
        %583 = vst.msk [vmem:[%s173 + $0xf0] sm:$0xff] %vm552, %v549
        %584 = vst.msk [vmem:[%s173 + $0xf8] sm:$0xff] %vm552, %v551
        %s585 = sand.u32 %s91, 1
        %s586 = sand.u32 %s91, 1
        %s587 = smul.addr %s586, 256
        %s588 = scalar_lea.vmem [#allocation3], %s587
        // Predicated region
        $region33: #{tpu_custom_call.1} parent=31 // pred_check
          %p589 = pneg %p101
        $region34: #{tpu_custom_call.1} parent=31 // pred_check_branch
          %591 = sbr.rel (%p589) target = $region36
        $region35: #{tpu_custom_call.1} parent=31 // pred_region
          %s592 = smul.u32 32, %s15
          %s593 = ssub.s32 38, %s592
          %p594 = scmp.lt.s32.totalorder %s593, 32
          %s595 = scalar_select %p594, %s593, 32
          %s596 = smul.u32 8, %s595
          %p597 = scmp.ne.s32.totalorder 0, %s596
          %s598 = smul.addr %s592, 8
          %s599 = scalar_lea.vmem %s3, %s598
          // Predicated region
          $region37: #{tpu_custom_call.1} parent=35 // pred_check
            %p600 = pneg %p597
          $region38: #{tpu_custom_call.1} parent=35 // pred_check_branch
            %602 = sbr.rel (%p600) target = $region40
          $region39: #{tpu_custom_call.1} parent=35 // pred_region
            // Predicated region
            $region41: #{tpu_custom_call.1} parent=39 // pred_check
              _
            $region42: #{tpu_custom_call.1} parent=39 // pred_check_branch
              %604 = sbr.rel (0) target = $region44
            $region43: #{tpu_custom_call.1} parent=39 // pred_region
              // Predicated region
              $region63: #{tpu_custom_call.1} parent=43 // pred_check
                _
              $region64: #{tpu_custom_call.1} parent=43 // pred_check_branch
                %716 = sbr.rel (0) target = $region66
              $region65: #{tpu_custom_call.1} parent=43 // pred_region
                %s717 = sshrl.u32 %s595, 5
                // While loop
                $region67: #{tpu_custom_call.1} parent=65 // loop_pre_header
                  _
                $region68: #{tpu_custom_call.1} parent=65 // loop_header
                  %s719 = sphi 0, %s721
                  %p720 = scmp.ge.s32.totalorder %s719, %s717
                  %s724 = sphi 0, %s793
                  %s725 = sphi %s588, %s796
                  %s726 = sphi %s599, %s797
                $region69: #{tpu_custom_call.1} parent=65 // loop_header_branch
                  %723 = sbr.rel (%p720) target = $region73
                $region70: #{tpu_custom_call.1} parent=65 // loop_body
                  %v727 = vld [vmem:[%s725] sm:$0xff]
                  %728 = vst [vmem:[%s726] sm:$0xff] %v727
                  %v729 = vld [vmem:[%s725 + $0x8] sm:$0xff]
                  %730 = vst [vmem:[%s726 + $0x8] sm:$0xff] %v729
                  %v731 = vld [vmem:[%s725 + $0x10] sm:$0xff]
                  %732 = vst [vmem:[%s726 + $0x10] sm:$0xff] %v731
                  %v733 = vld [vmem:[%s725 + $0x18] sm:$0xff]
                  %734 = vst [vmem:[%s726 + $0x18] sm:$0xff] %v733
                  %v735 = vld [vmem:[%s725 + $0x20] sm:$0xff]
                  %736 = vst [vmem:[%s726 + $0x20] sm:$0xff] %v735
                  %v737 = vld [vmem:[%s725 + $0x28] sm:$0xff]
                  %738 = vst [vmem:[%s726 + $0x28] sm:$0xff] %v737
                  %v739 = vld [vmem:[%s725 + $0x30] sm:$0xff]
                  %740 = vst [vmem:[%s726 + $0x30] sm:$0xff] %v739
                  %v741 = vld [vmem:[%s725 + $0x38] sm:$0xff]
                  %742 = vst [vmem:[%s726 + $0x38] sm:$0xff] %v741
                  %v743 = vld [vmem:[%s725 + $0x40] sm:$0xff]
                  %744 = vst [vmem:[%s726 + $0x40] sm:$0xff] %v743
                  %v745 = vld [vmem:[%s725 + $0x48] sm:$0xff]
                  %746 = vst [vmem:[%s726 + $0x48] sm:$0xff] %v745
                  %v747 = vld [vmem:[%s725 + $0x50] sm:$0xff]
                  %748 = vst [vmem:[%s726 + $0x50] sm:$0xff] %v747
                  %v749 = vld [vmem:[%s725 + $0x58] sm:$0xff]
                  %750 = vst [vmem:[%s726 + $0x58] sm:$0xff] %v749
                  %v751 = vld [vmem:[%s725 + $0x60] sm:$0xff]
                  %752 = vst [vmem:[%s726 + $0x60] sm:$0xff] %v751
                  %v753 = vld [vmem:[%s725 + $0x68] sm:$0xff]
                  %754 = vst [vmem:[%s726 + $0x68] sm:$0xff] %v753
                  %v755 = vld [vmem:[%s725 + $0x70] sm:$0xff]
                  %756 = vst [vmem:[%s726 + $0x70] sm:$0xff] %v755
                  %v757 = vld [vmem:[%s725 + $0x78] sm:$0xff]
                  %758 = vst [vmem:[%s726 + $0x78] sm:$0xff] %v757
                  %v759 = vld [vmem:[%s725 + $0x80] sm:$0xff]
                  %760 = vst [vmem:[%s726 + $0x80] sm:$0xff] %v759
                  %v761 = vld [vmem:[%s725 + $0x88] sm:$0xff]
                  %762 = vst [vmem:[%s726 + $0x88] sm:$0xff] %v761
                  %v763 = vld [vmem:[%s725 + $0x90] sm:$0xff]
                  %764 = vst [vmem:[%s726 + $0x90] sm:$0xff] %v763
                  %v765 = vld [vmem:[%s725 + $0x98] sm:$0xff]
                  %766 = vst [vmem:[%s726 + $0x98] sm:$0xff] %v765
                  %v767 = vld [vmem:[%s725 + $0xa0] sm:$0xff]
                  %768 = vst [vmem:[%s726 + $0xa0] sm:$0xff] %v767
                  %v769 = vld [vmem:[%s725 + $0xa8] sm:$0xff]
                  %770 = vst [vmem:[%s726 + $0xa8] sm:$0xff] %v769
                  %v771 = vld [vmem:[%s725 + $0xb0] sm:$0xff]
                  %772 = vst [vmem:[%s726 + $0xb0] sm:$0xff] %v771
                  %v773 = vld [vmem:[%s725 + $0xb8] sm:$0xff]
                  %774 = vst [vmem:[%s726 + $0xb8] sm:$0xff] %v773
                  %v775 = vld [vmem:[%s725 + $0xc0] sm:$0xff]
                  %776 = vst [vmem:[%s726 + $0xc0] sm:$0xff] %v775
                  %v777 = vld [vmem:[%s725 + $0xc8] sm:$0xff]
                  %778 = vst [vmem:[%s726 + $0xc8] sm:$0xff] %v777
                  %v779 = vld [vmem:[%s725 + $0xd0] sm:$0xff]
                  %780 = vst [vmem:[%s726 + $0xd0] sm:$0xff] %v779
                  %v781 = vld [vmem:[%s725 + $0xd8] sm:$0xff]
                  %782 = vst [vmem:[%s726 + $0xd8] sm:$0xff] %v781
                  %v783 = vld [vmem:[%s725 + $0xe0] sm:$0xff]
                  %784 = vst [vmem:[%s726 + $0xe0] sm:$0xff] %v783
                  %v785 = vld [vmem:[%s725 + $0xe8] sm:$0xff]
                  %786 = vst [vmem:[%s726 + $0xe8] sm:$0xff] %v785
                  %v787 = vld [vmem:[%s725 + $0xf0] sm:$0xff]
                  %788 = vst [vmem:[%s726 + $0xf0] sm:$0xff] %v787
                  %v789 = vld [vmem:[%s725 + $0xf8] sm:$0xff]
                  %790 = vst [vmem:[%s726 + $0xf8] sm:$0xff] %v789
                  %s791 = sadd.s32 1, %s724
                  %p792 = scmp.ge.s32.totalorder %s791, %s717
                  %s793 = scalar_select %p792, 0, %s791
                  %s794 = smul.u32 %s793, 256
                  %s795 = smul.u32 %s793, 256
                  %s796 = scalar_lea.vmem %s588, %s794 [#allocation3]
                  %s797 = scalar_lea.vmem %s599, %s795
                $region71: #{tpu_custom_call.1} parent=65 // loop_footer
                  %s721 = sadd.s32 %s719, 1
                $region72: #{tpu_custom_call.1} parent=65 // loop_footer_branch
                  %718 = sbr.rel target = $region68
                $region73: #{tpu_custom_call.1} parent=65 // loop_exit
                  _
                %s798 = sshrl.u32 %s595, 5
                %s799 = sand.u32 %s595, 31
                %s800 = smul.u32 %s798, 32
                %s801 = smul.u32 8, %s800
                %s802 = scalar_lea.vmem %s588, %s801 [#allocation3]
                %s803 = smul.u32 8, %s800
                %s804 = scalar_lea.vmem %s599, %s803
                // While loop
                $region74: #{tpu_custom_call.1} parent=65 // loop_pre_header
                  _
                $region75: #{tpu_custom_call.1} parent=65 // loop_header
                  %s806 = sphi 0, %s808
                  %p807 = scmp.ge.s32.totalorder %s806, %s799
                  %s811 = sphi 0, %s818
                  %s812 = sphi %s802, %s821
                  %s813 = sphi %s804, %s822
                $region76: #{tpu_custom_call.1} parent=65 // loop_header_branch
                  %810 = sbr.rel (%p807) target = $region80
                $region77: #{tpu_custom_call.1} parent=65 // loop_body
                  %v814 = vld [vmem:[%s812] sm:$0xff]
                  %815 = vst [vmem:[%s813] sm:$0xff] %v814
                  %s816 = sadd.s32 1, %s811
                  %p817 = scmp.ge.s32.totalorder %s816, %s799
                  %s818 = scalar_select %p817, 0, %s816
                  %s819 = smul.u32 %s818, 8
                  %s820 = smul.u32 %s818, 8
                  %s821 = scalar_lea.vmem %s802, %s819 [#allocation3]
                  %s822 = scalar_lea.vmem %s804, %s820
                $region78: #{tpu_custom_call.1} parent=65 // loop_footer
                  %s808 = sadd.s32 %s806, 1
                $region79: #{tpu_custom_call.1} parent=65 // loop_footer_branch
                  %805 = sbr.rel target = $region75
                $region80: #{tpu_custom_call.1} parent=65 // loop_exit
                  _
              $region66: #{tpu_custom_call.1} parent=43 // pred_fallthru
                _
              // Predicated region
              $region81: #{tpu_custom_call.1} parent=43 // pred_check
                _
              $region82: #{tpu_custom_call.1} parent=43 // pred_check_branch
                %824 = sbr.rel target = $region84
              $region83: #{tpu_custom_call.1} parent=43 // pred_region
                _
              $region84: #{tpu_custom_call.1} parent=43 // pred_fallthru
                _
            $region44: #{tpu_custom_call.1} parent=39 // pred_fallthru
              _
            // Predicated region
            $region45: #{tpu_custom_call.1} parent=39 // pred_check
              _
            $region46: #{tpu_custom_call.1} parent=39 // pred_check_branch
              %606 = sbr.rel target = $region48
            $region47: #{tpu_custom_call.1} parent=39 // pred_region
              %s608 = ssub.s32 256, 1
              %s609 = sshrl.u32 %s595, 5
              // While loop
              $region49: #{tpu_custom_call.1} parent=47 // loop_pre_header
                _
              $region50: #{tpu_custom_call.1} parent=47 // loop_header
                %s611 = sphi 0, %s613
                %p612 = scmp.ge.s32.totalorder %s611, %s609
                %s616 = sphi 0, %s685
                %s617 = sphi %s588, %s688
                %s618 = sphi %s599, %s689
              $region51: #{tpu_custom_call.1} parent=47 // loop_header_branch
                %615 = sbr.rel (%p612) target = $region55
              $region52: #{tpu_custom_call.1} parent=47 // loop_body
                %v619 = vld [vmem:[%s617] sm:%s608]
                %620 = vst [vmem:[%s618] sm:%s608] %v619
                %v621 = vld [vmem:[%s617 + $0x8] sm:%s608]
                %622 = vst [vmem:[%s618 + $0x8] sm:%s608] %v621
                %v623 = vld [vmem:[%s617 + $0x10] sm:%s608]
                %624 = vst [vmem:[%s618 + $0x10] sm:%s608] %v623
                %v625 = vld [vmem:[%s617 + $0x18] sm:%s608]
                %626 = vst [vmem:[%s618 + $0x18] sm:%s608] %v625
                %v627 = vld [vmem:[%s617 + $0x20] sm:%s608]
                %628 = vst [vmem:[%s618 + $0x20] sm:%s608] %v627
                %v629 = vld [vmem:[%s617 + $0x28] sm:%s608]
                %630 = vst [vmem:[%s618 + $0x28] sm:%s608] %v629
                %v631 = vld [vmem:[%s617 + $0x30] sm:%s608]
                %632 = vst [vmem:[%s618 + $0x30] sm:%s608] %v631
                %v633 = vld [vmem:[%s617 + $0x38] sm:%s608]
                %634 = vst [vmem:[%s618 + $0x38] sm:%s608] %v633
                %v635 = vld [vmem:[%s617 + $0x40] sm:%s608]
                %636 = vst [vmem:[%s618 + $0x40] sm:%s608] %v635
                %v637 = vld [vmem:[%s617 + $0x48] sm:%s608]
                %638 = vst [vmem:[%s618 + $0x48] sm:%s608] %v637
                %v639 = vld [vmem:[%s617 + $0x50] sm:%s608]
                %640 = vst [vmem:[%s618 + $0x50] sm:%s608] %v639
                %v641 = vld [vmem:[%s617 + $0x58] sm:%s608]
                %642 = vst [vmem:[%s618 + $0x58] sm:%s608] %v641
                %v643 = vld [vmem:[%s617 + $0x60] sm:%s608]
                %644 = vst [vmem:[%s618 + $0x60] sm:%s608] %v643
                %v645 = vld [vmem:[%s617 + $0x68] sm:%s608]
                %646 = vst [vmem:[%s618 + $0x68] sm:%s608] %v645
                %v647 = vld [vmem:[%s617 + $0x70] sm:%s608]
                %648 = vst [vmem:[%s618 + $0x70] sm:%s608] %v647
                %v649 = vld [vmem:[%s617 + $0x78] sm:%s608]
                %650 = vst [vmem:[%s618 + $0x78] sm:%s608] %v649
                %v651 = vld [vmem:[%s617 + $0x80] sm:%s608]
                %652 = vst [vmem:[%s618 + $0x80] sm:%s608] %v651
                %v653 = vld [vmem:[%s617 + $0x88] sm:%s608]
                %654 = vst [vmem:[%s618 + $0x88] sm:%s608] %v653
                %v655 = vld [vmem:[%s617 + $0x90] sm:%s608]
                %656 = vst [vmem:[%s618 + $0x90] sm:%s608] %v655
                %v657 = vld [vmem:[%s617 + $0x98] sm:%s608]
                %658 = vst [vmem:[%s618 + $0x98] sm:%s608] %v657
                %v659 = vld [vmem:[%s617 + $0xa0] sm:%s608]
                %660 = vst [vmem:[%s618 + $0xa0] sm:%s608] %v659
                %v661 = vld [vmem:[%s617 + $0xa8] sm:%s608]
                %662 = vst [vmem:[%s618 + $0xa8] sm:%s608] %v661
                %v663 = vld [vmem:[%s617 + $0xb0] sm:%s608]
                %664 = vst [vmem:[%s618 + $0xb0] sm:%s608] %v663
                %v665 = vld [vmem:[%s617 + $0xb8] sm:%s608]
                %666 = vst [vmem:[%s618 + $0xb8] sm:%s608] %v665
                %v667 = vld [vmem:[%s617 + $0xc0] sm:%s608]
                %668 = vst [vmem:[%s618 + $0xc0] sm:%s608] %v667
                %v669 = vld [vmem:[%s617 + $0xc8] sm:%s608]
                %670 = vst [vmem:[%s618 + $0xc8] sm:%s608] %v669
                %v671 = vld [vmem:[%s617 + $0xd0] sm:%s608]
                %672 = vst [vmem:[%s618 + $0xd0] sm:%s608] %v671
                %v673 = vld [vmem:[%s617 + $0xd8] sm:%s608]
                %674 = vst [vmem:[%s618 + $0xd8] sm:%s608] %v673
                %v675 = vld [vmem:[%s617 + $0xe0] sm:%s608]
                %676 = vst [vmem:[%s618 + $0xe0] sm:%s608] %v675
                %v677 = vld [vmem:[%s617 + $0xe8] sm:%s608]
                %678 = vst [vmem:[%s618 + $0xe8] sm:%s608] %v677
                %v679 = vld [vmem:[%s617 + $0xf0] sm:%s608]
                %680 = vst [vmem:[%s618 + $0xf0] sm:%s608] %v679
                %v681 = vld [vmem:[%s617 + $0xf8] sm:%s608]
                %682 = vst [vmem:[%s618 + $0xf8] sm:%s608] %v681
                %s683 = sadd.s32 1, %s616
                %p684 = scmp.ge.s32.totalorder %s683, %s609
                %s685 = scalar_select %p684, 0, %s683
                %s686 = smul.u32 %s685, 256
                %s687 = smul.u32 %s685, 256
                %s688 = scalar_lea.vmem %s588, %s686 [#allocation3]
                %s689 = scalar_lea.vmem %s599, %s687
              $region53: #{tpu_custom_call.1} parent=47 // loop_footer
                %s613 = sadd.s32 %s611, 1
              $region54: #{tpu_custom_call.1} parent=47 // loop_footer_branch
                %610 = sbr.rel target = $region50
              $region55: #{tpu_custom_call.1} parent=47 // loop_exit
                _
              %s690 = sshrl.u32 %s595, 5
              %s691 = sand.u32 %s595, 31
              %s692 = smul.u32 %s690, 32
              %s693 = smul.u32 8, %s692
              %s694 = scalar_lea.vmem %s588, %s693 [#allocation3]
              %s695 = smul.u32 8, %s692
              %s696 = scalar_lea.vmem %s599, %s695
              // While loop
              $region56: #{tpu_custom_call.1} parent=47 // loop_pre_header
                _
              $region57: #{tpu_custom_call.1} parent=47 // loop_header
                %s698 = sphi 0, %s700
                %p699 = scmp.ge.s32.totalorder %s698, %s691
                %s703 = sphi 0, %s710
                %s704 = sphi %s694, %s713
                %s705 = sphi %s696, %s714
              $region58: #{tpu_custom_call.1} parent=47 // loop_header_branch
                %702 = sbr.rel (%p699) target = $region62
              $region59: #{tpu_custom_call.1} parent=47 // loop_body
                %v706 = vld [vmem:[%s704] sm:%s608]
                %707 = vst [vmem:[%s705] sm:%s608] %v706
                %s708 = sadd.s32 1, %s703
                %p709 = scmp.ge.s32.totalorder %s708, %s691
                %s710 = scalar_select %p709, 0, %s708
                %s711 = smul.u32 %s710, 8
                %s712 = smul.u32 %s710, 8
                %s713 = scalar_lea.vmem %s694, %s711 [#allocation3]
                %s714 = scalar_lea.vmem %s696, %s712
              $region60: #{tpu_custom_call.1} parent=47 // loop_footer
                %s700 = sadd.s32 %s698, 1
              $region61: #{tpu_custom_call.1} parent=47 // loop_footer_branch
                %697 = sbr.rel target = $region57
              $region62: #{tpu_custom_call.1} parent=47 // loop_exit
                _
            $region48: #{tpu_custom_call.1} parent=39 // pred_fallthru
              _
          $region40: #{tpu_custom_call.1} parent=35 // pred_fallthru
            _
          %825 = vnop
        $region36: #{tpu_custom_call.1} parent=31 // pred_fallthru
          _
      $region32: #{tpu_custom_call.1} parent=5 // pred_fallthru
        _
      %p826 = scmp.le.s32.totalorder 2, %s10
      // Predicated region
      $region85: #{tpu_custom_call.1} parent=5 // pred_check
        %p827 = pneg %p826
      $region86: #{tpu_custom_call.1} parent=5 // pred_check_branch
        %829 = sbr.rel (%p827) target = $region88
      $region87: #{tpu_custom_call.1} parent=5 // pred_region
        %s830 = ssub.s32 %s10, 2
        // Predicated region
        $region89: #{tpu_custom_call.1} parent=87 // pred_check
          %p831 = pneg %p107
        $region90: #{tpu_custom_call.1} parent=87 // pred_check_branch
          %833 = sbr.rel (%p831) target = $region92
        $region91: #{tpu_custom_call.1} parent=87 // pred_region
          %s834 = sand.u32 %s92, 1
          %s835 = sand.u32 %s92, 1
          %s836 = smul.addr %s835, 256
          %s837 = scalar_lea.vmem [#allocation3], %s836
        $region92: #{tpu_custom_call.1} parent=87 // pred_fallthru
          _
      $region88: #{tpu_custom_call.1} parent=5 // pred_fallthru
        _
    $region6: #{tpu_custom_call.1} parent=1 // loop_footer
      %s14 = sadd.s32 1, %s10
    $region7: #{tpu_custom_call.1} parent=1 // loop_footer_branch
      %9 = sbr.rel target = $region3
    $region8: #{tpu_custom_call.1} parent=1 // loop_exit
      _

</llo_original>
